<compile_context>
chip_gen: v7x
topology: tpu7x:2x2x1
jax: 0.10.0
libtpu: 0.0.40
codegen_flags: <defaults>
</compile_context>

<pallas_src>
import jax
import jax.numpy as jnp
from jax.experimental import pallas as pl
from jax.experimental.pallas import tpu as pltpu


# --------------------------------------------------------------------------- #
# helpers
# --------------------------------------------------------------------------- #
def _round_up(x, m):
    return (x + m - 1) // m * m


def _cdiv(a, b):
    return -(-a // b)


def _n_geometry(d_model, block_n):
    """Balanced split of the (padded) output-feature dim into num_n tiles of TN."""
    dn128 = _round_up(d_model, 128)
    if dn128 <= block_n:
        return dn128, dn128, 1                      # single lane-dense tile, no waste
    num_n = _cdiv(dn128, block_n)
    tn = _round_up(_cdiv(dn128, num_n), 128)        # <= 127 lanes of waste total
    return tn, tn * num_n, num_n


def _vmem_budget_bytes():
    """Usable VMEM per core, generation aware (128 MiB v5e/v6e vs 64 MiB v7x)."""
    cap = 64 * 2**20
    try:
        info = pltpu.get_tpu_info()
        cap = int(getattr(info, "vmem_capacity_bytes", cap))
    except Exception:
        pass
    if cap >= 96 * 2**20:                           # 128 MiB parts (v5e / v6e)
        return min(100 * 2**20, int(cap * 0.8))
    return int(cap * 0.8)                           # leave headroom on 64 MiB v7x


# --------------------------------------------------------------------------- #
# kernel
# --------------------------------------------------------------------------- #
def _ffn_kernel(x_ref, w_ref, b_ref, o_ref):
    # x_ref: (TM, DK)  tokens (compute dtype)
    # w_ref: (DK, TN)  fc2 weight, pre-transposed to [in, out] at prep time
    # b_ref: (1,  TN)  fc2 bias, float32
    # o_ref: (TM, TN)  output tile
    y = jnp.dot(x_ref[...], w_ref[...], preferred_element_type=jnp.float32)
    o_ref[...] = (y + b_ref[...]).astype(o_ref.dtype)


# --------------------------------------------------------------------------- #
# parameter prep (run ONCE, outside the per-call hot path)
# --------------------------------------------------------------------------- #
def prepare_fc2_params(w2, b2, *, compute_dtype=jnp.bfloat16, block_n=1024):
    """Cast, pad and transpose fc2 params once so calls do zero weight traffic prep.

    w2: [d_model, d_model] in PyTorch nn.Linear layout ([out, in]).
    Returns a dict consumed by position_wise_ffn(..., prepared=...).
    """
    d_model = w2.shape[0]
    dk = _round_up(d_model, 128)                    # contraction dim padding
    tn, dn, _ = _n_geometry(d_model, block_n)       # output-feature dim padding
    w_t = jnp.pad(w2.astype(compute_dtype),
                  ((0, dn - d_model), (0, dk - d_model))).T          # -> (DK, DN)
    b_row = jnp.pad(b2.astype(jnp.float32), ((0, dn - d_model),)).reshape(1, dn)
    return dict(w=w_t, b=b_row, d_model=d_model, block_n=block_n,
                compute_dtype=compute_dtype, tn=tn)


# --------------------------------------------------------------------------- #
# forward
# --------------------------------------------------------------------------- #
def position_wise_ffn(x, w1=None, b1=None, w2=None, b2=None, *,
                      prepared=None,
                      compute_dtype=jnp.bfloat16,
                      out_dtype=None,
                      block_m=1024, block_n=1024):
    """Forward matching the PyTorch module's data flow: return fc2(x).

    x        : [B, S, d_model]
    w1, b1   : fc1 params (dead code in the reference forward -> unused)
    w2, b2   : fc2 params (PyTorch [out, in] layout) OR pass `prepared=`
               from prepare_fc2_params() to avoid per-call weight prep.
    """
    del w1, b1  # fc1 / relu results are discarded by the reference forward

    if prepared is None:
        prepared = prepare_fc2_params(w2, b2, compute_dtype=compute_dtype,
                                      block_n=block_n)

    w_t, b_row = prepared["w"], prepared["b"]
    d_model = prepared["d_model"]
    compute_dtype = prepared["compute_dtype"]
    block_n = prepared["block_n"]

    B, S, dm = x.shape
    assert dm == d_model, f"x feature dim {dm} != prepared d_model {d_model}"
    M = B * S

    dk = _round_up(d_model, 128)
    tn, dn, num_n = _n_geometry(d_model, block_n)
    assert w_t.shape == (dk, dn) and tn == prepared["tn"], \
        "prepared params were built with a different block_n"

    out_dtype = out_dtype or x.dtype
    cbytes = jnp.dtype(compute_dtype).itemsize
    obytes = jnp.dtype(out_dtype).itemsize

    # ---- token tiling (balanced split; >=2 M tiles for megacore when num_n==1)
    sub = 16                                        # bf16-safe sublane multiple
    num_m = max(1, _cdiv(M, block_m))
    if num_n == 1 and num_m == 1 and M >= 256:
        num_m = 2                                   # keep both v7x TCs busy
    tm = _round_up(_cdiv(M, num_m), sub)

    # ---- fit the pipelined footprint inside the generation-aware VMEM budget
    budget = _vmem_budget_bytes()
    wbuf = 2                                        # weight buffers (resident on inner axis)

    def footprint(tm_, wbuf_):
        return (2 * tm_ * dk * cbytes               # x tile (streamed, double-buffered)
                + wbuf_ * dk * tn * cbytes          # weight tile (changes on outer axis only)
                + 2 * tn * 4                        # bias
                + 2 * tm_ * tn * obytes)            # output tile

    while footprint(tm, wbuf) > budget:
        if wbuf == 2:
            wbuf = 1                                # single-buffer the resident weight tile
        elif tm > sub:
            tm = max(sub, _round_up(tm // 2, sub))  # shrink tiles instead of under-clamping
        else:
            break                                   # TODO(synk): K-split for extreme d_model

    num_m = _cdiv(M, tm)
    m_pad = num_m * tm

    # ---- per-call activation prep (weights were prepped once, above) --------
    x2d = x.reshape(M, d_model).astype(compute_dtype)
    if (m_pad, dk) != (M, d_model):
        x2d = jnp.pad(x2d, ((0, m_pad - M), (0, dk - d_model)))

    vmem_limit = int(min(budget, max(32 * 2**20, footprint(tm, wbuf) * 3 // 2)))

    cost = pl.CostEstimate(
        flops=2 * m_pad * dk * dn,
        transcendentals=0,
        bytes_accessed=(num_n * m_pad * dk * cbytes     # x re-read once per N tile
                        + dk * dn * cbytes              # W2 read exactly once
                        + dn * 4
                        + m_pad * dn * obytes))

    w_spec_kwargs = {"pipeline_mode": pl.Buffered(1)} if wbuf == 1 else {}

    out2d = pl.pallas_call(
        _ffn_kernel,
        out_shape=jax.ShapeDtypeStruct((m_pad, dn), out_dtype),
        grid_spec=pltpu.PrefetchScalarGridSpec(
            num_scalar_prefetch=0,
            grid=(num_n, num_m),                    # N outer (W2 streamed once), tokens inner
            in_specs=[
                pl.BlockSpec((tm, dk), lambda j, i: (i, 0)),                 # x: inner stream
                pl.BlockSpec((dk, tn), lambda j, i: (0, j), **w_spec_kwargs),  # W2^T: outer only
                pl.BlockSpec((1, tn), lambda j, i: (0, j)),                  # bias
            ],
            out_specs=pl.BlockSpec((tm, tn), lambda j, i: (i, j)),
        ),
        compiler_params=pltpu.CompilerParams(
            dimension_semantics=("parallel", "parallel"),
            vmem_limit_bytes=vmem_limit),
        cost_estimate=cost,
    )(x2d, w_t, b_row)

    return out2d[:M, :d_model].reshape(B, S, d_model)


# --------------------------------------------------------------------------- #
# demo / correctness check
# --------------------------------------------------------------------------- #
if __name__ == "__main__":
    d_model = 32
    B, S = 2, 8

    key = jax.random.PRNGKey(0)
    kx, k1w, k1b, k2w, k2b = jax.random.split(key, 5)

    # Deterministic params mimicking nn.Linear init: U(-1/sqrt(in), 1/sqrt(in))
    bound = 1.0 / (d_model ** 0.5)
    w1 = jax.random.uniform(k1w, (d_model, d_model), jnp.float32, -bound, bound)
    b1 = jax.random.uniform(k1b, (d_model,), jnp.float32, -bound, bound)
    w2 = jax.random.uniform(k2w, (d_model, d_model), jnp.float32, -bound, bound)
    b2 = jax.random.uniform(k2b, (d_model,), jnp.float32, -bound, bound)

    x = jax.random.normal(kx, (B, S, d_model), jnp.float32)

    # Reference (same semantics as the PyTorch forward: return fc2(x)).
    ref = x @ w2.T + b2

    # f32-operand path (on-the-fly prep): tight correctness check.
    out_f32 = jax.block_until_ready(
        position_wise_ffn(x, w1, b1, w2, b2, compute_dtype=jnp.float32))
    assert out_f32.shape == (B, S, d_model)
    assert jnp.allclose(out_f32, ref, atol=1e-4, rtol=1e-4)

    # Default perf path: weights prepped ONCE (cast/pad/transpose hoisted out
    # of the per-call hot path), bf16 operands, f32 accumulation.
    prepared = prepare_fc2_params(w2, b2)           # run once at param-prep time
    out_bf16 = jax.block_until_ready(
        position_wise_ffn(x, w1, b1, prepared=prepared))
    assert out_bf16.shape == (B, S, d_model)
    assert jnp.allclose(out_bf16, ref, atol=5e-2, rtol=5e-2)

    # Second call reusing the same prepared weights (no weight prep traffic).
    out_again = jax.block_until_ready(
        position_wise_ffn(x, w1, b1, prepared=prepared, out_dtype=jnp.bfloat16))
    assert out_again.shape == (B, S, d_model)
    assert jnp.allclose(out_again.astype(jnp.float32), ref, atol=5e-2, rtol=5e-2)

    print("KERNEL_OK")
</pallas_src>

<mosaic_0001>
module attributes {stable_mosaic.version = 11 : i64} {
  func.func @_ffn_kernel(%arg0: i32, %arg1: i32, %arg2: memref<16x128xf32, #tpu.memory_space<vmem>>, %arg3: memref<128x128xf32, #tpu.memory_space<vmem>>, %arg4: memref<1x128xf32, #tpu.memory_space<vmem>>, %arg5: memref<16x128xf32, #tpu.memory_space<vmem>>) attributes {dimension_semantics = [#tpu.dimension_semantics<parallel>, #tpu.dimension_semantics<parallel>], iteration_bounds = array<i64: 1, 1>, scalar_prefetch = 0 : i64, scratch_operands = 0 : i64, tpu.core_type = #tpu.core_type<tc>, window_params = [{transform_indices = @transform_0, window_bounds = array<i64: 16, 128>}, {transform_indices = @transform_1, window_bounds = array<i64: 128, 128>}, {transform_indices = @transform_2, window_bounds = array<i64: 1, 128>}, {transform_indices = @transform_3, window_bounds = array<i64: 16, 128>}]} {
    %c0 = arith.constant 0 : index
    %c0_0 = arith.constant 0 : index
    %0 = vector.load %arg2[%c0, %c0_0] : memref<16x128xf32, #tpu.memory_space<vmem>>, vector<16x128xf32>
    %c0_1 = arith.constant 0 : index
    %c0_2 = arith.constant 0 : index
    %1 = vector.load %arg3[%c0_1, %c0_2] : memref<128x128xf32, #tpu.memory_space<vmem>>, vector<128x128xf32>
    %cst = arith.constant dense<0.000000e+00> : vector<16x128xf32>
    %2 = tpu.matmul %0, %1, %cst {dimension_numbers = #tpu.dot_dimension_numbers<[1], [0], [0], [1], [0, 0, 1, 1], [], []>} : vector<16x128xf32>, vector<128x128xf32>, vector<16x128xf32> -> vector<16x128xf32>
    %c0_3 = arith.constant 0 : index
    %c0_4 = arith.constant 0 : index
    %3 = vector.load %arg4[%c0_3, %c0_4] : memref<1x128xf32, #tpu.memory_space<vmem>>, vector<1x128xf32>
    %4 = vector.broadcast %3 : vector<1x128xf32> to vector<16x128xf32>
    %5 = arith.addf %2, %4 : vector<16x128xf32>
    %c0_5 = arith.constant 0 : index
    %c0_6 = arith.constant 0 : index
    %6 = vector.load %arg5[%c0_5, %c0_6] : memref<16x128xf32, #tpu.memory_space<vmem>>, vector<16x128xf32>
    tpu.vector_store %arg5[%c0_5, %c0_6], %5 {strides = array<i32>} : memref<16x128xf32, #tpu.memory_space<vmem>>, vector<16x128xf32>,
    return
  }
  func.func @transform_0(%arg0: i32, %arg1: i32) -> (i32, i32) {
    %c0_i32 = arith.constant 0 : i32
    %c0_i32_0 = arith.constant 0 : i32
    return %arg1, %c0_i32 : i32, i32
  }
  func.func @transform_1(%arg0: i32, %arg1: i32) -> (i32, i32) {
    %c0_i32 = arith.constant 0 : i32
    %c0_i32_0 = arith.constant 0 : i32
    return %c0_i32, %arg0 : i32, i32
  }
  func.func @transform_2(%arg0: i32, %arg1: i32) -> (i32, i32) {
    %c0_i32 = arith.constant 0 : i32
    %c0_i32_0 = arith.constant 0 : i32
    return %c0_i32, %arg0 : i32, i32
  }
  func.func @transform_3(%arg0: i32, %arg1: i32) -> (i32, i32) {
    %c0_i32 = arith.constant 0 : i32
    return %arg1, %arg0 : i32, i32
  }
}

</mosaic_0001>

<llo_original>
// kernel: tpu_custom_call.1
$region0: #{tpu_custom_call.1}
  #allocation0 [shape = 'u32[]', space=smem, size = 0x4, offset = 0x4, fixed_abs, tag = 'smem constant byte address 0x4 - core index']
  #allocation1 [shape = 'u32[144,128]{1,0:T(1,128)}', space=vmem, size = 0x12000, scoped, tag = 'internal scratch']
  %s0 = inlined_call_operand.hbm [shape: f32[16,128], index: 0, kind: input, shape index: {}]
  %s1 = inlined_call_operand.hbm [shape: f32[128,128], index: 1, kind: input, shape index: {}]
  %s2 = inlined_call_operand.vmem [shape: f32[1,128], index: 2, kind: input, shape index: {}]
  %s3 = inlined_call_operand.hbm [shape: f32[16,128], index: 3, kind: output, shape index: {}]
  %s4 = sld [smem:[#allocation0]]
  $region30: #{tpu_custom_call.1} parent=0
    _
  %s6 = ssub.s32 1, %s4
  %s7 = scalar_select 0, %s6, %s4
  $region1: #{tpu_custom_call.1} parent=0
    #allocation2 [shape = 'u8[8192]{0}', space=vmem, size = 0x2000, scoped, tag = 'input window, operand 0, single buffered']
    #allocation3 [shape = 's32[1]{0}', space=sflag, size = 0x4, scoped, tag = 'scoped memory for tpu_custom_call.1']
    #allocation4 [shape = 's32[1]{0}', space=sflag, size = 0x4, scoped, tag = 'scoped memory for tpu_custom_call.1']
    #allocation5 [shape = 'u8[65536]{0}', space=vmem, size = 0x10000, scoped, tag = 'input window, operand 1, single buffered']
    #allocation6 [shape = 's32[1]{0}', space=sflag, size = 0x4, scoped, tag = 'scoped memory for tpu_custom_call.1']
    #allocation7 [shape = 'u8[8192]{0}', space=vmem, size = 0x2000, scoped, tag = 'output window, operand 0, single buffered']
    %8 = vsyncpa [#allocation3], 0
    %9 = vsyncpa [#allocation6], 0
    %10 = vsyncpa [#allocation4], 0
    // Predicated region
    $region2: #{tpu_custom_call.1} parent=1 // pred_check
      _
    $region3: #{tpu_custom_call.1} parent=1 // pred_check_branch
      %12 = sbr.rel (0) target = $region5
    $region4: #{tpu_custom_call.1} parent=1 // pred_region
      %s14 = ssub.s32 256, 256
      %15 = vsyncadd [#allocation3], %s14
      %s16 = sshll.u32 [#allocation2], 4
      %s17 = int_to_ptr.vmem [resolvable:$true] %s16
      %22 = dma.hbm_to_vmem [thread:$0]  %s0, 256, %s17, [#allocation3], 128, 128, 8
    $region5: #{tpu_custom_call.1} parent=1 // pred_fallthru
      _
    // Predicated region
    $region6: #{tpu_custom_call.1} parent=1 // pred_check
      _
    $region7: #{tpu_custom_call.1} parent=1 // pred_check_branch
      %24 = sbr.rel (0) target = $region9
    $region8: #{tpu_custom_call.1} parent=1 // pred_region
      %s26 = ssub.s32 2048, 2048
      %27 = vsyncadd [#allocation6], %s26
      %s28 = sshll.u32 [#allocation5], 4
      %s29 = int_to_ptr.vmem [resolvable:$true] %s28
      %34 = dma.hbm_to_vmem [thread:$0]  %s1, 2048, %s29, [#allocation6], 128, 128, 8
    $region9: #{tpu_custom_call.1} parent=1 // pred_fallthru
      _
    // Predicated region
    $region10: #{tpu_custom_call.1} parent=1 // pred_check
      _
    $region11: #{tpu_custom_call.1} parent=1 // pred_check_branch
      %36 = sbr.rel (0) target = $region13
    $region12: #{tpu_custom_call.1} parent=1 // pred_region
      _
    $region13: #{tpu_custom_call.1} parent=1 // pred_fallthru
      _
    // Predicated region
    $region14: #{tpu_custom_call.1} parent=1 // pred_check
      _
    $region15: #{tpu_custom_call.1} parent=1 // pred_check_branch
      %38 = sbr.rel (0) target = $region17
    $region16: #{tpu_custom_call.1} parent=1 // pred_region
      %39 = dma.done [#allocation3], 256
    $region17: #{tpu_custom_call.1} parent=1 // pred_fallthru
      _
    // Predicated region
    $region18: #{tpu_custom_call.1} parent=1 // pred_check
      _
    $region19: #{tpu_custom_call.1} parent=1 // pred_check_branch
      %41 = sbr.rel (0) target = $region21
    $region20: #{tpu_custom_call.1} parent=1 // pred_region
      %42 = dma.done [#allocation6], 2048
    $region21: #{tpu_custom_call.1} parent=1 // pred_fallthru
      _
    %v43 = vld [vmem:[#allocation2] sm:$0xff]
    %v44 = vld [vmem:[#allocation2 + $0x8] sm:$0xff]
    %v45 = vld [vmem:[#allocation5] sm:$0xff]
    %v46 = vld [vmem:[#allocation5 + $0x8] sm:$0xff]
    %v47 = vld [vmem:[#allocation5 + $0x10] sm:$0xff]
    %v48 = vld [vmem:[#allocation5 + $0x18] sm:$0xff]
    %v49 = vld [vmem:[#allocation5 + $0x20] sm:$0xff]
    %v50 = vld [vmem:[#allocation5 + $0x28] sm:$0xff]
    %v51 = vld [vmem:[#allocation5 + $0x30] sm:$0xff]
    %v52 = vld [vmem:[#allocation5 + $0x38] sm:$0xff]
    %v53 = vld [vmem:[#allocation5 + $0x40] sm:$0xff]
    %v54 = vld [vmem:[#allocation5 + $0x48] sm:$0xff]
    %v55 = vld [vmem:[#allocation5 + $0x50] sm:$0xff]
    %v56 = vld [vmem:[#allocation5 + $0x58] sm:$0xff]
    %v57 = vld [vmem:[#allocation5 + $0x60] sm:$0xff]
    %v58 = vld [vmem:[#allocation5 + $0x68] sm:$0xff]
    %v59 = vld [vmem:[#allocation5 + $0x70] sm:$0xff]
    %v60 = vld [vmem:[#allocation5 + $0x78] sm:$0xff]
    %v61 = vld [vmem:[%s2] sm:$0x1]
    %v63 = vlaneseq
    %v64 = vshrl.u32 %v63, 7
    %v65 = vsub.s32 0, %v64
    %v66 = vrot.slane %v61, %v65
    %68 = vmatprep.subr.mxu0 0.0
    %69 = vmatpush1.msra.mxu0 %v45
    %70 = vmatprep.subr.mxu0 0.0
    %71 = vmatpush1.msra.mxu0 %v46
    %72 = vmatprep.subr.mxu0 0.0
    %73 = vmatpush1.msra.mxu0 %v47
    %74 = vmatprep.subr.mxu0 0.0
    %75 = vmatpush1.msra.mxu0 %v48
    %76 = vmatprep.subr.mxu0 0.0
    %77 = vmatpush1.msra.mxu0 %v49
    %78 = vmatprep.subr.mxu0 0.0
    %79 = vmatpush1.msra.mxu0 %v50
    %80 = vmatprep.subr.mxu0 0.0
    %81 = vmatpush1.msra.mxu0 %v51
    %82 = vmatprep.subr.mxu0 0.0
    %83 = vmatpush1.msra.mxu0 %v52
    %84 = vmatprep.subr.mxu0 0.0
    %85 = vmatpush1.msra.mxu0 %v53
    %86 = vmatprep.subr.mxu0 0.0
    %87 = vmatpush1.msra.mxu0 %v54
    %88 = vmatprep.subr.mxu0 0.0
    %89 = vmatpush1.msra.mxu0 %v55
    %90 = vmatprep.subr.mxu0 0.0
    %91 = vmatpush1.msra.mxu0 %v56
    %92 = vmatprep.subr.mxu0 0.0
    %93 = vmatpush1.msra.mxu0 %v57
    %94 = vmatprep.subr.mxu0 0.0
    %95 = vmatpush1.msra.mxu0 %v58
    %96 = vmatprep.subr.mxu0 0.0
    %97 = vmatpush1.msra.mxu0 %v59
    %98 = vmatprep.subr.mxu0 0.0
    %99 = vmatpush1.msra.mxu0 %v60
    %100 = vmatprep.subr.mxu0 0.0
    %101 = vmatpush1.msra.mxu0 0.0
    %102 = vmatprep.subr.mxu0 0.0
    %103 = vmatpush1.msra.mxu0 0.0
    %104 = vmatprep.subr.mxu0 0.0
    %105 = vmatpush1.msra.mxu0 0.0
    %106 = vmatprep.subr.mxu0 0.0
    %107 = vmatpush1.msra.mxu0 0.0
    %108 = vmatprep.subr.mxu0 0.0
    %109 = vmatpush1.msra.mxu0 0.0
    %110 = vmatprep.subr.mxu0 0.0
    %111 = vmatpush1.msra.mxu0 0.0
    %112 = vmatprep.subr.mxu0 0.0
    %113 = vmatpush1.msra.mxu0 0.0
    %114 = vmatprep.subr.mxu0 0.0
    %115 = vmatpush1.msra.mxu0 0.0
    %116 = vmatprep.subr.mxu0 0.0
    %117 = vmatpush1.msra.mxu0 0.0
    %118 = vmatprep.subr.mxu0 0.0
    %119 = vmatpush1.msra.mxu0 0.0
    %120 = vmatprep.subr.mxu0 0.0
    %121 = vmatpush1.msra.mxu0 0.0
    %122 = vmatprep.subr.mxu0 0.0
    %123 = vmatpush1.msra.mxu0 0.0
    %124 = vmatprep.subr.mxu0 0.0
    %125 = vmatpush1.msra.mxu0 0.0
    %126 = vmatprep.subr.mxu0 0.0
    %127 = vmatpush1.msra.mxu0 0.0
    %128 = vmatprep.subr.mxu0 0.0
    %129 = vmatpush1.msra.mxu0 0.0
    %130 = vmatprep.subr.mxu0 0.0
    %131 = vmatpush1.msra.mxu0 0.0
    %132 = vmatprep.mubr.f32.mxu0 0.0
    %133 = vmatmul.mubr.f32.gmra.mrb[0].mxu0 %v43
    %v134 = vpop.f32.mrb[0].mxu0
    %v135 = vadd.f32 %v66, %v134
    %v136 = vpop.f32.mrb[0].mxu0
    %137 = vmatprep.mubr.f32.mxu0 0.0
    %138 = vmatmul.mubr.f32.gmra.mrb[0].mxu0 %v44
    %v139 = vpop.f32.mrb[0].mxu0
    %v140 = vadd.f32 %v66, %v139
    %v141 = vpop.f32.mrb[0].mxu0
    %142 = vdwg.mxu0
    %143 = vst [vmem:[#allocation7] sm:$0xff] %v135
    %144 = vst [vmem:[#allocation7 + $0x8] sm:$0xff] %v140
    // Predicated region
    $region22: #{tpu_custom_call.1} parent=1 // pred_check
      _
    $region23: #{tpu_custom_call.1} parent=1 // pred_check_branch
      %146 = sbr.rel (0) target = $region25
    $region24: #{tpu_custom_call.1} parent=1 // pred_region
      %s148 = ssub.s32 256, 256
      %149 = vsyncadd [#allocation4], %s148
      %s150 = sshll.u32 [#allocation7], 4
      %s151 = int_to_ptr.vmem [resolvable:$true] %s150
      %156 = dma.vmem_to_hbm [thread:$0]  %s151, 256, %s3, [#allocation4], 128, 128, 8
    $region25: #{tpu_custom_call.1} parent=1 // pred_fallthru
      _
    // Predicated region
    $region26: #{tpu_custom_call.1} parent=1 // pred_check
      _
    $region27: #{tpu_custom_call.1} parent=1 // pred_check_branch
      %158 = sbr.rel (0) target = $region29
    $region28: #{tpu_custom_call.1} parent=1 // pred_region
      %159 = dma.done [#allocation4], 256
    $region29: #{tpu_custom_call.1} parent=1 // pred_fallthru
      _
    %160 = vsyncpa [#allocation3], 1
    %161 = vsyncpa [#allocation6], 1
    %162 = vsyncpa [#allocation4], 1

</llo_original>
